<compile_context>
chip_gen: v5e
topology: v5e:2x2
jax: 0.10.0
libtpu: 0.0.40
codegen_flags: <defaults>
</compile_context>

<pallas_src>
import functools

import jax
import jax.numpy as jnp
from jax import lax
from jax.experimental import pallas as pl
from jax.experimental.pallas import tpu as pltpu


def center_loss_kernel(x_ref, c_ref, labels_ref, d_ref, *, c_chunk):
    x = x_ref[...]            # (tb, D) f32 feature tile
    labels = labels_ref[...]  # (tb, 1) int32
    tb, D = x.shape
    C = c_ref.shape[0]

    # Gather centers[labels] via a one-hot matmul on the MXU, chunked over the
    # class axis so the one-hot operand stays small in VMEM.  0/1 lhs +
    # HIGHEST precision + f32 accumulation => exact gather.
    sel = None
    for c0 in range(0, C, c_chunk):
        cc = min(c_chunk, C - c0)
        classes = lax.broadcasted_iota(jnp.int32, (tb, cc), 1) + c0
        onehot = (labels == classes).astype(jnp.float32)          # (tb, cc)
        part = jnp.einsum(
            "tc,cd->td", onehot, c_ref[c0:c0 + cc, :],
            preferred_element_type=jnp.float32,
            precision=lax.Precision.HIGHEST,
        )                                                         # (tb, D)
        sel = part if sel is None else sel + part

    diff = x - sel
    sq = diff * diff                                              # (tb, D)

    # Row-sum straight into lane-dense form: contract the D axis of ones(1, D)
    # against the D axis of sq (NT contraction, same pattern as the flash
    # reference kernel) -> (1, tb) row, stored as dense lanes.
    ones_row = jnp.ones((1, D), jnp.float32)
    d_row = jnp.einsum(
        "od,td->ot", ones_row, sq,
        preferred_element_type=jnp.float32,
        precision=lax.Precision.HIGHEST,
    )                                                             # (1, tb)
    d_ref[...] = jnp.clip(d_row, 1e-12, 1e12)


def _choose_batch_tile(B, C, D, block_b, c_chunk, vmem_budget):
    def round8(n):
        return ((n + 7) // 8) * 8

    tb = round8(min(block_b, max(B, 1)))
    # Give v7x's two TensorCores at least two grid steps to split once the
    # batch is large enough that the extra per-step overhead is negligible.
    if B >= 256:
        tb = min(tb, round8(-(-B // 2)))

    def working_set(t):
        return (
            2 * t * D * 4                 # x tile, double-buffered
            + 2 * t * 4                   # labels tile, double-buffered
            + 2 * t * 4                   # (1, t) output row, double-buffered
            + C * D * 4                   # centers, single-buffered
            + t * min(C, c_chunk) * 4     # one-hot operand
            + 3 * t * D * 4               # sel / diff / sq temporaries
        )

    while tb > 8 and working_set(tb) > vmem_budget:
        tb = max(8, round8(tb // 2))
    return tb, working_set(tb)


def center_loss(x, centers, labels, *, block_b=512):
    """x: (B, D) f32, centers: (C, D) f32, labels: (B,) int -> scalar f32 loss."""
    B, D = x.shape
    C, _ = centers.shape

    c_chunk = min(C, 2048)
    vmem_budget = 32 * 1024 * 1024        # conservative across v5e/v6e/v7x
    tb, ws = _choose_batch_tile(B, C, D, block_b, c_chunk, vmem_budget)

    Bp = ((B + tb - 1) // tb) * tb
    if Bp != B:
        x = jnp.pad(x, ((0, Bp - B), (0, 0)))
        labels = jnp.pad(labels, (0, Bp - B))
    labels2d = labels.reshape(Bp, 1).astype(jnp.int32)
    num_tiles = Bp // tb

    vmem_limit = min(64 * 1024 * 1024, max(32 * 1024 * 1024, 2 * ws))

    dists = pl.pallas_call(
        functools.partial(center_loss_kernel, c_chunk=c_chunk),
        out_shape=jax.ShapeDtypeStruct((num_tiles, tb), jnp.float32),
        grid=(num_tiles,),
        in_specs=[
            pl.BlockSpec((tb, D), lambda i: (i, 0)),        # x tile
            pl.BlockSpec((C, D), lambda i: (0, 0),          # centers: resident,
                         pipeline_mode=pl.Buffered(1)),     # single-buffered
            pl.BlockSpec((tb, 1), lambda i: (i, 0)),        # labels tile
        ],
        out_specs=pl.BlockSpec((1, tb), lambda i: (i, 0)),  # lane-dense row
        compiler_params=pltpu.CompilerParams(
            dimension_semantics=("parallel",),              # megacore split on v7x
            vmem_limit_bytes=vmem_limit,
        ),
    )(x, centers, labels2d)

    per_sample = dists.reshape(Bp)[:B]
    # PyTorch clamps AFTER masking: the C-1 masked zeros per row each become 1e-12.
    return jnp.sum(per_sample) / jnp.float32(B) + jnp.float32((C - 1) * 1e-12)


def center_loss_ref(x, centers, labels):
    """Pure-JAX reference replicating the PyTorch forward exactly."""
    B = x.shape[0]
    C = centers.shape[0]
    distmat = (
        jnp.sum(x ** 2, axis=1, keepdims=True)
        + jnp.sum(centers ** 2, axis=1)[None, :]
        - 2.0 * x @ centers.T
    )
    mask = (labels[:, None] == jnp.arange(C)[None, :]).astype(jnp.float32)
    dist = jnp.clip(distmat * mask, 1e-12, 1e12)
    return jnp.sum(dist) / B


if __name__ == "__main__":
    # Module defaults: num_classes=10, feat_dim=2; small batch.
    num_classes = 10
    feat_dim = 2
    batch = 8

    key = jax.random.PRNGKey(0)
    kx, kc, kl = jax.random.split(key, 3)

    x = jax.random.normal(kx, (batch, feat_dim), dtype=jnp.float32)
    centers = jax.random.normal(kc, (num_classes, feat_dim), dtype=jnp.float32)
    labels = jax.random.randint(kl, (batch,), 0, num_classes, dtype=jnp.int32)

    loss = center_loss(x, centers, labels)
    loss = jax.block_until_ready(loss)

    ref = center_loss_ref(x, centers, labels)
    assert jnp.allclose(loss, ref, rtol=1e-5, atol=1e-5), (loss, ref)

    print("KERNEL_OK")
</pallas_src>

<mosaic_0001>
module attributes {stable_mosaic.version = 11 : i64} {
  func.func @center_loss_kernel(%arg0: i32, %arg1: memref<8x2xf32, #tpu.memory_space<vmem>>, %arg2: memref<10x2xf32, #tpu.memory_space<vmem>>, %arg3: memref<8x1xi32, #tpu.memory_space<vmem>>, %arg4: memref<1x8xf32, #tpu.memory_space<vmem>>) attributes {dimension_semantics = [#tpu.dimension_semantics<parallel>], iteration_bounds = array<i64: 1>, scalar_prefetch = 0 : i64, scratch_operands = 0 : i64, tpu.core_type = #tpu.core_type<tc>, window_params = [{transform_indices = @transform_0, window_bounds = array<i64: 8, 2>}, {pipeline_mode = #tpu.pipeline_mode<synchronous>, transform_indices = @transform_1, window_bounds = array<i64: 10, 2>}, {transform_indices = @transform_2, window_bounds = array<i64: 8, 1>}, {transform_indices = @transform_3, window_bounds = array<i64: 1, 8>}]} {
    %c0 = arith.constant 0 : index
    %c0_0 = arith.constant 0 : index
    %0 = vector.load %arg1[%c0, %c0_0] : memref<8x2xf32, #tpu.memory_space<vmem>>, vector<8x2xf32>
    %c0_1 = arith.constant 0 : index
    %c0_2 = arith.constant 0 : index
    %1 = vector.load %arg3[%c0_1, %c0_2] : memref<8x1xi32, #tpu.memory_space<vmem>>, vector<8x1xi32>
    %2 = tpu.iota {dimensions = array<i32: 1>} : vector<8x10xi32>
    %c0_i32 = arith.constant 0 : i32
    %3 = vector.broadcast %c0_i32 : i32 to vector<8x10xi32>
    %4 = arith.addi %2, %3 : vector<8x10xi32>
    %5 = vector.broadcast %1 : vector<8x1xi32> to vector<8x10xi32>
    %6 = arith.cmpi eq, %5, %4 : vector<8x10xi32>
    %7 = arith.extui %6 : vector<8x10xi1> to vector<8x10xi32>
    %8 = arith.sitofp %7 : vector<8x10xi32> to vector<8x10xf32>
    %c0_3 = arith.constant 0 : index
    %c0_4 = arith.constant 0 : index
    %9 = vector.load %arg2[%c0_3, %c0_4] : memref<10x2xf32, #tpu.memory_space<vmem>>, vector<10x2xf32>
    "tpu.trace_start"() <{level = 10 : i32, message = "tc,cd->td"}> : () -> ()
    %cst = arith.constant dense<0.000000e+00> : vector<8x2xf32>
    %10 = tpu.matmul %8, %9, %cst {dimension_numbers = #tpu.dot_dimension_numbers<[1], [0], [0], [1], [0, 0, 1, 1], [], []>, precision = #tpu.contract_precision<fp32>} : vector<8x10xf32>, vector<10x2xf32>, vector<8x2xf32> -> vector<8x2xf32>
    "tpu.trace_stop"() : () -> ()
    %11 = arith.subf %0, %10 : vector<8x2xf32>
    %12 = arith.mulf %11, %11 : vector<8x2xf32>
    %cst_5 = arith.constant 1.000000e+00 : f32
    %13 = vector.broadcast %cst_5 : f32 to vector<1x2xf32>
    "tpu.trace_start"() <{level = 10 : i32, message = "od,td->ot"}> : () -> ()
    %cst_6 = arith.constant dense<0.000000e+00> : vector<1x8xf32>
    %14 = tpu.matmul %13, %12, %cst_6 {dimension_numbers = #tpu.dot_dimension_numbers<[1], [1], [0], [0], [0, 0, 1, 0], [], []>, precision = #tpu.contract_precision<fp32>} : vector<1x2xf32>, vector<8x2xf32>, vector<1x8xf32> -> vector<1x8xf32>
    %cst_7 = arith.constant 9.99999996E-13 : f32
    %cst_8 = arith.constant 9.99999995E+11 : f32
    "tpu.trace_stop"() : () -> ()
    %15 = vector.broadcast %cst_7 : f32 to vector<1x8xf32>
    %16 = arith.maximumf %15, %14 : vector<1x8xf32>
    %17 = vector.broadcast %cst_8 : f32 to vector<1x8xf32>
    %18 = arith.minimumf %17, %16 : vector<1x8xf32>
    %c0_9 = arith.constant 0 : index
    %c0_10 = arith.constant 0 : index
    %19 = vector.load %arg4[%c0_9, %c0_10] : memref<1x8xf32, #tpu.memory_space<vmem>>, vector<1x8xf32>
    tpu.vector_store %arg4[%c0_9, %c0_10], %18 {strides = array<i32>} : memref<1x8xf32, #tpu.memory_space<vmem>>, vector<1x8xf32>,
    return
  }
  func.func @transform_0(%arg0: i32) -> (i32, i32) {
    %c0_i32 = arith.constant 0 : i32
    %c0_i32_0 = arith.constant 0 : i32
    return %arg0, %c0_i32 : i32, i32
  }
  func.func @transform_1(%arg0: i32) -> (i32, i32) {
    %c0_i32 = arith.constant 0 : i32
    %c0_i32_0 = arith.constant 0 : i32
    %c0_i32_1 = arith.constant 0 : i32
    return %c0_i32, %c0_i32_0 : i32, i32
  }
  func.func @transform_2(%arg0: i32) -> (i32, i32) {
    %c0_i32 = arith.constant 0 : i32
    %c0_i32_0 = arith.constant 0 : i32
    return %arg0, %c0_i32 : i32, i32
  }
  func.func @transform_3(%arg0: i32) -> (i32, i32) {
    %c0_i32 = arith.constant 0 : i32
    %c0_i32_0 = arith.constant 0 : i32
    return %arg0, %c0_i32 : i32, i32
  }
}

</mosaic_0001>

<llo_original>
// kernel: tpu_custom_call.1
$region0: #{tpu_custom_call.1}
  #allocation0 [shape = 'u32[]', space=smem, size = 0x4, offset = 0x4, fixed_abs, tag = 'smem constant byte address 0x4 - core index']
  #allocation1 [shape = 'u32[72,128]{1,0:T(1,128)}', space=vmem, size = 0x9000, scoped, tag = 'internal scratch']
  %s0 = inlined_call_operand.vmem [shape: f32[8,2], index: 0, kind: input, shape index: {}]
  %s1 = inlined_call_operand.vmem [shape: f32[10,2], index: 1, kind: input, shape index: {}]
  %s2 = inlined_call_operand.vmem [shape: s32[8,1], index: 2, kind: input, shape index: {}]
  %s3 = inlined_call_operand.hbm [shape: f32[1,8], index: 3, kind: output, shape index: {}]
  %s4 = sld [smem:[#allocation0]]
  $region22: #{tpu_custom_call.1} parent=0
    _
  %s6 = ssub.s32 1, %s4
  %s7 = scalar_select 0, %s6, %s4
  $region1: #{tpu_custom_call.1} parent=0
    #allocation2 [shape = 'u8[512]{0}', space=vmem, size = 0x400, scoped, tag = 'output window, operand 0, single buffered']
    #allocation3 [shape = 's32[1]{0}', space=sflag, size = 0x4, scoped, tag = 'scoped memory for tpu_custom_call.1']
    %8 = vsyncpa [#allocation3], 0
    // Predicated region
    $region2: #{tpu_custom_call.1} parent=1 // pred_check
      _
    $region3: #{tpu_custom_call.1} parent=1 // pred_check_branch
      %10 = sbr.rel (0) target = $region5
    $region4: #{tpu_custom_call.1} parent=1 // pred_region
      _
    $region5: #{tpu_custom_call.1} parent=1 // pred_fallthru
      _
    // Predicated region
    $region6: #{tpu_custom_call.1} parent=1 // pred_check
      _
    $region7: #{tpu_custom_call.1} parent=1 // pred_check_branch
      %12 = sbr.rel (0) target = $region9
    $region8: #{tpu_custom_call.1} parent=1 // pred_region
      _
    $region9: #{tpu_custom_call.1} parent=1 // pred_fallthru
      _
    // Predicated region
    $region10: #{tpu_custom_call.1} parent=1 // pred_check
      _
    $region11: #{tpu_custom_call.1} parent=1 // pred_check_branch
      %14 = sbr.rel (0) target = $region13
    $region12: #{tpu_custom_call.1} parent=1 // pred_region
      _
    $region13: #{tpu_custom_call.1} parent=1 // pred_fallthru
      _
    %v15 = vld [vmem:[%s0] sm:$0xff]
    %v16 = vld [vmem:[%s2] sm:$0xff]
    %v17 = vlaneseq
    %v18 = vand.u32 %v17, 127
    %19 = vset.pattern.permute.xlu0 0
    %20 = vperm.xlu0 %19, %v16
    %v21 = vpop.permute.xlu0 %20
    %vm22 = vcmp.eq.s32.totalorder %v21, %v18
    %v23 = vsel %vm22, 1, 0
    %v24 = vcvt.s32.f32 %v23
    %v25 = vld [vmem:[%s1] sm:$0xff]
    %v26 = vld [vmem:[%s1 + $0x8] sm:$0x3]
    %vm27 = vcmask 80896
    %v29 = vsel %vm27, %v24, 0
    %vm31 = vcmask 1041408
    %v33 = vsel %vm31, %v26, 0
    %35 = vmatpush.msra.mxu0 0.0
    %36 = vmatpush.msra.mxu0 0.0
    %37 = vmatpush.msra.mxu0 0.0
    %38 = vmatpush.msra.mxu0 0.0
    %39 = vmatpush.msra.mxu0 0.0
    %40 = vmatpush.msra.mxu0 0.0
    %41 = vmatpush.msra.mxu0 0.0
    %42 = vmatpush.msra.mxu0 0.0
    %43 = vmatpush.msra.mxu0 0.0
    %44 = vmatpush.msra.mxu0 0.0
    %45 = vmatpush.msra.mxu0 0.0
    %46 = vmatpush.msra.mxu0 0.0
    %47 = vmatpush.msra.mxu0 0.0
    %48 = vmatpush.msra.mxu0 0.0
    %v49 = vand.u32 %v33, 4294901760
    %50 = vmatpush.msra.mxu0 %v49
    %v51 = vand.u32 %v25, 4294901760
    %52 = vmatpush.msra.mxu0 %v51
    %v53 = vand.u32 %v29, 4294901760
    %v54 = vsub.f32 %v29, %v53
    %v55 = vand.u32 %v54, 4294901760
    %v56 = vsub.f32 %v54, %v55
    %v57 = vand.u32 %v56, 4294901760
    %58 = vmatmul.f32.gmra.mxu0 %v57
    %v59 = vpop.f32.mrf.mxu0
    %v60 = vadd.f32 0.0, %v59
    %61 = vdwg.mxu0
    %62 = vmatpush.msra.mxu0 0.0
    %63 = vmatpush.msra.mxu0 0.0
    %64 = vmatpush.msra.mxu0 0.0
    %65 = vmatpush.msra.mxu0 0.0
    %66 = vmatpush.msra.mxu0 0.0
    %67 = vmatpush.msra.mxu0 0.0
    %68 = vmatpush.msra.mxu0 0.0
    %69 = vmatpush.msra.mxu0 0.0
    %70 = vmatpush.msra.mxu0 0.0
    %71 = vmatpush.msra.mxu0 0.0
    %72 = vmatpush.msra.mxu0 0.0
    %73 = vmatpush.msra.mxu0 0.0
    %74 = vmatpush.msra.mxu0 0.0
    %75 = vmatpush.msra.mxu0 0.0
    %v76 = vand.u32 %v33, 4294901760
    %v77 = vsub.f32 %v33, %v76
    %v78 = vand.u32 %v77, 4294901760
    %v79 = vsub.f32 %v77, %v78
    %v80 = vand.u32 %v79, 4294901760
    %81 = vmatpush.msra.mxu0 %v80
    %v82 = vand.u32 %v25, 4294901760
    %v83 = vsub.f32 %v25, %v82
    %v84 = vand.u32 %v83, 4294901760
    %v85 = vsub.f32 %v83, %v84
    %v86 = vand.u32 %v85, 4294901760
    %87 = vmatpush.msra.mxu0 %v86
    %v88 = vand.u32 %v29, 4294901760
    %89 = vmatmul.f32.gmra.mxu0 %v88
    %v90 = vpop.f32.mrf.mxu0
    %v91 = vadd.f32 %v60, %v90
    %92 = vdwg.mxu0
    %93 = vmatpush.msra.mxu0 0.0
    %94 = vmatpush.msra.mxu0 0.0
    %95 = vmatpush.msra.mxu0 0.0
    %96 = vmatpush.msra.mxu0 0.0
    %97 = vmatpush.msra.mxu0 0.0
    %98 = vmatpush.msra.mxu0 0.0
    %99 = vmatpush.msra.mxu0 0.0
    %100 = vmatpush.msra.mxu0 0.0
    %101 = vmatpush.msra.mxu0 0.0
    %102 = vmatpush.msra.mxu0 0.0
    %103 = vmatpush.msra.mxu0 0.0
    %104 = vmatpush.msra.mxu0 0.0
    %105 = vmatpush.msra.mxu0 0.0
    %106 = vmatpush.msra.mxu0 0.0
    %v107 = vand.u32 %v33, 4294901760
    %v108 = vsub.f32 %v33, %v107
    %109 = vmatpush.msra.mxu0 %v108
    %v110 = vand.u32 %v25, 4294901760
    %v111 = vsub.f32 %v25, %v110
    %112 = vmatpush.msra.mxu0 %v111
    %v113 = vand.u32 %v29, 4294901760
    %v114 = vsub.f32 %v29, %v113
    %115 = vmatmul.f32.gmra.mxu0 %v114
    %v116 = vpop.f32.mrf.mxu0
    %v117 = vadd.f32 %v91, %v116
    %118 = vdwg.mxu0
    %119 = vmatpush.msra.mxu0 0.0
    %120 = vmatpush.msra.mxu0 0.0
    %121 = vmatpush.msra.mxu0 0.0
    %122 = vmatpush.msra.mxu0 0.0
    %123 = vmatpush.msra.mxu0 0.0
    %124 = vmatpush.msra.mxu0 0.0
    %125 = vmatpush.msra.mxu0 0.0
    %126 = vmatpush.msra.mxu0 0.0
    %127 = vmatpush.msra.mxu0 0.0
    %128 = vmatpush.msra.mxu0 0.0
    %129 = vmatpush.msra.mxu0 0.0
    %130 = vmatpush.msra.mxu0 0.0
    %131 = vmatpush.msra.mxu0 0.0
    %132 = vmatpush.msra.mxu0 0.0
    %v133 = vand.u32 %v33, 4294901760
    %134 = vmatpush.msra.mxu0 %v133
    %v135 = vand.u32 %v25, 4294901760
    %136 = vmatpush.msra.mxu0 %v135
    %v137 = vand.u32 %v29, 4294901760
    %v138 = vsub.f32 %v29, %v137
    %v139 = vand.u32 %v138, 4294901760
    %140 = vmatmul.f32.gmra.mxu0 %v139
    %v141 = vpop.f32.mrf.mxu0
    %v142 = vadd.f32 %v117, %v141
    %143 = vdwg.mxu0
    %144 = vmatpush.msra.mxu0 0.0
    %145 = vmatpush.msra.mxu0 0.0
    %146 = vmatpush.msra.mxu0 0.0
    %147 = vmatpush.msra.mxu0 0.0
    %148 = vmatpush.msra.mxu0 0.0
    %149 = vmatpush.msra.mxu0 0.0
    %150 = vmatpush.msra.mxu0 0.0
    %151 = vmatpush.msra.mxu0 0.0
    %152 = vmatpush.msra.mxu0 0.0
    %153 = vmatpush.msra.mxu0 0.0
    %154 = vmatpush.msra.mxu0 0.0
    %155 = vmatpush.msra.mxu0 0.0
    %156 = vmatpush.msra.mxu0 0.0
    %157 = vmatpush.msra.mxu0 0.0
    %v158 = vand.u32 %v33, 4294901760
    %v159 = vsub.f32 %v33, %v158
    %v160 = vand.u32 %v159, 4294901760
    %161 = vmatpush.msra.mxu0 %v160
    %v162 = vand.u32 %v25, 4294901760
    %v163 = vsub.f32 %v25, %v162
    %v164 = vand.u32 %v163, 4294901760
    %165 = vmatpush.msra.mxu0 %v164
    %v166 = vand.u32 %v29, 4294901760
    %167 = vmatmul.f32.gmra.mxu0 %v166
    %v168 = vpop.f32.mrf.mxu0
    %v169 = vadd.f32 %v142, %v168
    %170 = vdwg.mxu0
    %171 = vmatpush.msra.mxu0 0.0
    %172 = vmatpush.msra.mxu0 0.0
    %173 = vmatpush.msra.mxu0 0.0
    %174 = vmatpush.msra.mxu0 0.0
    %175 = vmatpush.msra.mxu0 0.0
    %176 = vmatpush.msra.mxu0 0.0
    %177 = vmatpush.msra.mxu0 0.0
    %178 = vmatpush.msra.mxu0 0.0
    %179 = vmatpush.msra.mxu0 0.0
    %180 = vmatpush.msra.mxu0 0.0
    %181 = vmatpush.msra.mxu0 0.0
    %182 = vmatpush.msra.mxu0 0.0
    %183 = vmatpush.msra.mxu0 0.0
    %184 = vmatpush.msra.mxu0 0.0
    %v185 = vand.u32 %v33, 4294901760
    %186 = vmatpush.msra.mxu0 %v185
    %v187 = vand.u32 %v25, 4294901760
    %188 = vmatpush.msra.mxu0 %v187
    %v189 = vand.u32 %v29, 4294901760
    %190 = vmatmul.f32.gmra.mxu0 %v189
    %v191 = vpop.f32.mrf.mxu0
    %v192 = vadd.f32 %v169, %v191
    %193 = vdwg.mxu0
    %v194 = vsub.f32 %v15, %v192
    %v195 = vmul.f32 %v194, %v194
    %vm196 = vcmask 15360
    %v198 = vsel %vm196, 1.0, 0
    %v201 = vsel %vm196, %v195, 0
    %203 = vmatpush.xpose.msra.mxu0 0.0
    %204 = vmatpush.xpose.msra.mxu0 0.0
    %205 = vmatpush.xpose.msra.mxu0 0.0
    %206 = vmatpush.xpose.msra.mxu0 0.0
    %207 = vmatpush.xpose.msra.mxu0 0.0
    %208 = vmatpush.xpose.msra.mxu0 0.0
    %209 = vmatpush.xpose.msra.mxu0 0.0
    %210 = vmatpush.xpose.msra.mxu0 0.0
    %211 = vmatpush.xpose.msra.mxu0 0.0
    %212 = vmatpush.xpose.msra.mxu0 0.0
    %213 = vmatpush.xpose.msra.mxu0 0.0
    %214 = vmatpush.xpose.msra.mxu0 0.0
    %215 = vmatpush.xpose.msra.mxu0 0.0
    %216 = vmatpush.xpose.msra.mxu0 0.0
    %217 = vmatpush.xpose.msra.mxu0 0.0
    %v218 = vand.u32 %v201, 4294901760
    %219 = vmatpush.xpose.msra.mxu0 %v218
    %v220 = vand.u32 %v198, 4294901760
    %v221 = vsub.f32 %v198, %v220
    %v222 = vand.u32 %v221, 4294901760
    %v223 = vsub.f32 %v221, %v222
    %v224 = vand.u32 %v223, 4294901760
    %225 = vmatmul.f32.gmra.mxu0 %v224
    %v226 = vpop.f32.mrf.mxu0
    %v227 = vadd.f32 0.0, %v226
    %228 = vdwg.mxu0
    %229 = vmatpush.xpose.msra.mxu0 0.0
    %230 = vmatpush.xpose.msra.mxu0 0.0
    %231 = vmatpush.xpose.msra.mxu0 0.0
    %232 = vmatpush.xpose.msra.mxu0 0.0
    %233 = vmatpush.xpose.msra.mxu0 0.0
    %234 = vmatpush.xpose.msra.mxu0 0.0
    %235 = vmatpush.xpose.msra.mxu0 0.0
    %236 = vmatpush.xpose.msra.mxu0 0.0
    %237 = vmatpush.xpose.msra.mxu0 0.0
    %238 = vmatpush.xpose.msra.mxu0 0.0
    %239 = vmatpush.xpose.msra.mxu0 0.0
    %240 = vmatpush.xpose.msra.mxu0 0.0
    %241 = vmatpush.xpose.msra.mxu0 0.0
    %242 = vmatpush.xpose.msra.mxu0 0.0
    %243 = vmatpush.xpose.msra.mxu0 0.0
    %v244 = vand.u32 %v201, 4294901760
    %v245 = vsub.f32 %v201, %v244
    %v246 = vand.u32 %v245, 4294901760
    %v247 = vsub.f32 %v245, %v246
    %v248 = vand.u32 %v247, 4294901760
    %249 = vmatpush.xpose.msra.mxu0 %v248
    %v250 = vand.u32 %v198, 4294901760
    %251 = vmatmul.f32.gmra.mxu0 %v250
    %v252 = vpop.f32.mrf.mxu0
    %v253 = vadd.f32 %v227, %v252
    %254 = vdwg.mxu0
    %255 = vmatpush.xpose.msra.mxu0 0.0
    %256 = vmatpush.xpose.msra.mxu0 0.0
    %257 = vmatpush.xpose.msra.mxu0 0.0
    %258 = vmatpush.xpose.msra.mxu0 0.0
    %259 = vmatpush.xpose.msra.mxu0 0.0
    %260 = vmatpush.xpose.msra.mxu0 0.0
    %261 = vmatpush.xpose.msra.mxu0 0.0
    %262 = vmatpush.xpose.msra.mxu0 0.0
    %263 = vmatpush.xpose.msra.mxu0 0.0
    %264 = vmatpush.xpose.msra.mxu0 0.0
    %265 = vmatpush.xpose.msra.mxu0 0.0
    %266 = vmatpush.xpose.msra.mxu0 0.0
    %267 = vmatpush.xpose.msra.mxu0 0.0
    %268 = vmatpush.xpose.msra.mxu0 0.0
    %269 = vmatpush.xpose.msra.mxu0 0.0
    %v270 = vand.u32 %v201, 4294901760
    %v271 = vsub.f32 %v201, %v270
    %272 = vmatpush.xpose.msra.mxu0 %v271
    %v273 = vand.u32 %v198, 4294901760
    %v274 = vsub.f32 %v198, %v273
    %275 = vmatmul.f32.gmra.mxu0 %v274
    %v276 = vpop.f32.mrf.mxu0
    %v277 = vadd.f32 %v253, %v276
    %278 = vdwg.mxu0
    %279 = vmatpush.xpose.msra.mxu0 0.0
    %280 = vmatpush.xpose.msra.mxu0 0.0
    %281 = vmatpush.xpose.msra.mxu0 0.0
    %282 = vmatpush.xpose.msra.mxu0 0.0
    %283 = vmatpush.xpose.msra.mxu0 0.0
    %284 = vmatpush.xpose.msra.mxu0 0.0
    %285 = vmatpush.xpose.msra.mxu0 0.0
    %286 = vmatpush.xpose.msra.mxu0 0.0
    %287 = vmatpush.xpose.msra.mxu0 0.0
    %288 = vmatpush.xpose.msra.mxu0 0.0
    %289 = vmatpush.xpose.msra.mxu0 0.0
    %290 = vmatpush.xpose.msra.mxu0 0.0
    %291 = vmatpush.xpose.msra.mxu0 0.0
    %292 = vmatpush.xpose.msra.mxu0 0.0
    %293 = vmatpush.xpose.msra.mxu0 0.0
    %v294 = vand.u32 %v201, 4294901760
    %295 = vmatpush.xpose.msra.mxu0 %v294
    %v296 = vand.u32 %v198, 4294901760
    %v297 = vsub.f32 %v198, %v296
    %v298 = vand.u32 %v297, 4294901760
    %299 = vmatmul.f32.gmra.mxu0 %v298
    %v300 = vpop.f32.mrf.mxu0
    %v301 = vadd.f32 %v277, %v300
    %302 = vdwg.mxu0
    %303 = vmatpush.xpose.msra.mxu0 0.0
    %304 = vmatpush.xpose.msra.mxu0 0.0
    %305 = vmatpush.xpose.msra.mxu0 0.0
    %306 = vmatpush.xpose.msra.mxu0 0.0
    %307 = vmatpush.xpose.msra.mxu0 0.0
    %308 = vmatpush.xpose.msra.mxu0 0.0
    %309 = vmatpush.xpose.msra.mxu0 0.0
    %310 = vmatpush.xpose.msra.mxu0 0.0
    %311 = vmatpush.xpose.msra.mxu0 0.0
    %312 = vmatpush.xpose.msra.mxu0 0.0
    %313 = vmatpush.xpose.msra.mxu0 0.0
    %314 = vmatpush.xpose.msra.mxu0 0.0
    %315 = vmatpush.xpose.msra.mxu0 0.0
    %316 = vmatpush.xpose.msra.mxu0 0.0
    %317 = vmatpush.xpose.msra.mxu0 0.0
    %v318 = vand.u32 %v201, 4294901760
    %v319 = vsub.f32 %v201, %v318
    %v320 = vand.u32 %v319, 4294901760
    %321 = vmatpush.xpose.msra.mxu0 %v320
    %v322 = vand.u32 %v198, 4294901760
    %323 = vmatmul.f32.gmra.mxu0 %v322
    %v324 = vpop.f32.mrf.mxu0
    %v325 = vadd.f32 %v301, %v324
    %326 = vdwg.mxu0
    %327 = vmatpush.xpose.msra.mxu0 0.0
    %328 = vmatpush.xpose.msra.mxu0 0.0
    %329 = vmatpush.xpose.msra.mxu0 0.0
    %330 = vmatpush.xpose.msra.mxu0 0.0
    %331 = vmatpush.xpose.msra.mxu0 0.0
    %332 = vmatpush.xpose.msra.mxu0 0.0
    %333 = vmatpush.xpose.msra.mxu0 0.0
    %334 = vmatpush.xpose.msra.mxu0 0.0
    %335 = vmatpush.xpose.msra.mxu0 0.0
    %336 = vmatpush.xpose.msra.mxu0 0.0
    %337 = vmatpush.xpose.msra.mxu0 0.0
    %338 = vmatpush.xpose.msra.mxu0 0.0
    %339 = vmatpush.xpose.msra.mxu0 0.0
    %340 = vmatpush.xpose.msra.mxu0 0.0
    %341 = vmatpush.xpose.msra.mxu0 0.0
    %v342 = vand.u32 %v201, 4294901760
    %343 = vmatpush.xpose.msra.mxu0 %v342
    %v344 = vand.u32 %v198, 4294901760
    %345 = vmatmul.f32.gmra.mxu0 %v344
    %v346 = vpop.f32.mrf.mxu0
    %v347 = vadd.f32 %v325, %v346
    %348 = vdwg.mxu0
    %v349 = vmax.f32 %v347, 1e-12
    %v350 = vmin.f32 %v349, 1e+12
    %vm351 = vcmask 57344
    %352 = vst.msk [vmem:[#allocation2] sm:$0x1] %vm351, %v350
    // Predicated region
    $region14: #{tpu_custom_call.1} parent=1 // pred_check
      _
    $region15: #{tpu_custom_call.1} parent=1 // pred_check_branch
      %354 = sbr.rel (0) target = $region17
    $region16: #{tpu_custom_call.1} parent=1 // pred_region
      %356 = vsyncadd [#allocation3], 0
      %s358 = sshll.u32 [#allocation2], 4
      %s359 = int_to_ptr.vmem [resolvable:$true] %s358
      %s360 = sshll.u32 %s3, 4
      %s361 = int_to_ptr.hbm [resolvable:$true] %s360
      %363 = dma.vmem_to_hbm [thread:$0]  %s359, 16, %s361, [#allocation3]
    $region17: #{tpu_custom_call.1} parent=1 // pred_fallthru
      _
    // Predicated region
    $region18: #{tpu_custom_call.1} parent=1 // pred_check
      _
    $region19: #{tpu_custom_call.1} parent=1 // pred_check_branch
      %365 = sbr.rel (0) target = $region21
    $region20: #{tpu_custom_call.1} parent=1 // pred_region
      %367 = dma.done [#allocation3], 16
    $region21: #{tpu_custom_call.1} parent=1 // pred_fallthru
      _
    %368 = vsyncpa [#allocation3], 1

</llo_original>
